<compile_context>
chip_gen: v7x
topology: tpu7x:2x2x1
jax: 0.10.0
libtpu: 0.0.40
codegen_flags: <defaults>
</compile_context>

<pallas_src>
import math

import jax
import jax.numpy as jnp
from jax.experimental import pallas as pl
from jax.experimental.pallas import tpu as pltpu

# ----- model config (HGNN(in_ch, n_class, n_hid)) -----
N_NODES = 32        # number of genes / graph nodes
IN_CH = 16          # in_ch  (node feature dim)
N_HID = 128         # n_hid  (from the spec)
N_CLASS = 4         # n_class (number of unique labels / hyperedges)
BATCH = 8           # number of feature matrices evaluated in one launch

# ----- packed parameter slab layout (all row offsets multiples of 8) -----
P_W1 = 0                       # rows [0, 16)   : W1  (IN_CH, N_HID)
P_B1 = 16                      # row  16        : b1  (1, N_HID)
P_W2 = 24                      # rows [24, 152) : W2  (N_HID, N_CLASS) lane-padded to 128
P_B2 = 152                     # row  152       : b2  (1, N_CLASS)     lane-padded to 128
P_ROWS = 160                   # total slab rows (f32 slab = 80 KB)


# ---------------------------------------------------------------------------
# Pallas kernel: one full HGNN forward (both HGNN_conv layers) per grid step
# ---------------------------------------------------------------------------
def hgnn_kernel(x_ref, g_ref, p_ref, out_ref):
    f32 = jnp.float32
    bf16 = jnp.bfloat16

    x = x_ref[...]                                   # (N, IN_CH)  f32
    g = g_ref[...]                                   # (N, N)      f32
    g_bf = g.astype(bf16)

    # static, sublane-aligned views into the packed parameter slab
    w1 = p_ref[P_W1:P_W1 + IN_CH, :]                 # (IN_CH, N_HID)
    b1 = p_ref[P_B1:P_B1 + 1, :]                     # (1, N_HID)
    w2 = p_ref[P_W2:P_W2 + N_HID, :]                 # (N_HID, 128)  cols >= N_CLASS are 0
    b2 = p_ref[P_B2:P_B2 + 1, :]                     # (1, 128)      cols >= N_CLASS are 0

    # ---- hgc1, reordered: G@(x W1 + b1) == (G@x)@W1 + (G@1) * b1 ----
    gsum = jnp.sum(g, axis=1, keepdims=True)                              # (N, 1) f32
    t = jnp.dot(g_bf, x.astype(bf16), preferred_element_type=f32)         # (N, IN_CH)
    h = jnp.dot(t.astype(bf16), w1.astype(bf16),
                preferred_element_type=f32)                               # (N, N_HID)
    h = jnp.maximum(h + gsum * b1, 0.0)                                   # bias + ReLU in f32

    # F.dropout(x, 0.5): inference-mode identity.
    # TODO(synk): training-mode dropout would use pltpu.prng_seed +
    #             pltpu.stateful_bernoulli and a 1/(1-p) rescale.

    # ---- hgc2: G @ (h W2 + b2), lane-padded to 128 columns ----
    o = jnp.dot(h.astype(bf16), w2.astype(bf16),
                preferred_element_type=f32) + b2                          # (N, 128)
    out_ref[...] = jnp.dot(g_bf, o.astype(bf16),
                           preferred_element_type=f32)                    # (N, 128)


def hgnn_forward(x_batch, G, params_slab):
    """x_batch: (B, N, IN_CH) f32; G: (N, N) f32; params_slab: (P_ROWS, N_HID) f32."""
    B = x_batch.shape[0]
    out_padded = pl.pallas_call(
        hgnn_kernel,
        out_shape=jax.ShapeDtypeStruct((B, N_NODES, N_HID), jnp.float32),
        grid=(B,),
        in_specs=[
            # per-batch-step feature tile (leading dim squeezed away)
            pl.BlockSpec((None, N_NODES, IN_CH), lambda b: (b, 0, 0)),
            # shared, VMEM-resident across all grid steps (constant block index)
            pl.BlockSpec((N_NODES, N_NODES), lambda b: (0, 0)),
            pl.BlockSpec((P_ROWS, N_HID), lambda b: (0, 0)),
        ],
        out_specs=pl.BlockSpec((None, N_NODES, N_HID), lambda b: (b, 0, 0)),
        compiler_params=pltpu.CompilerParams(
            dimension_semantics=("parallel",)),
    )(x_batch, G, params_slab)
    # drop the lane padding (columns >= N_CLASS are exactly zero by construction)
    return out_padded[:, :, :N_CLASS]


# ---------------------------------------------------------------------------
# host-side graph construction (mirrors the demo's preprocessing, in JAX)
# ---------------------------------------------------------------------------
def build_incidence_matrix_from_labels(y):
    classes = jnp.arange(N_CLASS)
    return (y[:, None] == classes[None, :]).astype(jnp.float32)           # (N, E)


def generate_G_from_H(H):
    Dv = jnp.sum(H, axis=1)                                               # node degrees
    De = jnp.sum(H, axis=0)                                               # edge degrees
    Dv_inv_sqrt = jnp.where(Dv > 0, 1.0 / jnp.sqrt(jnp.maximum(Dv, 1e-12)), 0.0)
    De_inv = jnp.where(De > 0, 1.0 / jnp.maximum(De, 1e-12), 0.0)
    # G = Dv^-1/2 @ H @ De^-1 @ H^T @ Dv^-1/2   (all D* diagonal)
    M = Dv_inv_sqrt[:, None] * H * De_inv[None, :]                        # (N, E)
    G = (M @ H.T) * Dv_inv_sqrt[None, :]                                  # (N, N)
    return G


# ---------------------------------------------------------------------------
# deterministic parameter init (shapes follow HGNN_conv) + slab packing
# ---------------------------------------------------------------------------
def init_params(key):
    k1, k2, k3, k4 = jax.random.split(key, 4)

    def u(k, shape, fan_out):
        stdv = 1.0 / math.sqrt(fan_out)
        return jax.random.uniform(k, shape, jnp.float32, -stdv, stdv)

    return {
        "W1": u(k1, (IN_CH, N_HID), N_HID),
        "b1": u(k2, (1, N_HID), N_HID),
        "W2": u(k3, (N_HID, N_CLASS), N_CLASS),
        "b2": u(k4, (1, N_CLASS), N_CLASS),
    }


def pack_params(p):
    slab = jnp.zeros((P_ROWS, N_HID), jnp.float32)
    slab = slab.at[P_W1:P_W1 + IN_CH, :].set(p["W1"])
    slab = slab.at[P_B1, :].set(p["b1"][0])
    slab = slab.at[P_W2:P_W2 + N_HID, :N_CLASS].set(p["W2"])
    slab = slab.at[P_B2, :N_CLASS].set(p["b2"][0])
    return slab


# ---------------------------------------------------------------------------
# pure-JAX f32 reference (mirrors the PyTorch forward, inference dropout)
# ---------------------------------------------------------------------------
def reference_forward(x_batch, G, p):
    h = jnp.einsum("nm,bmf->bnf", G, x_batch @ p["W1"] + p["b1"])
    h = jnp.maximum(h, 0.0)
    return jnp.einsum("nm,bmf->bnf", G, h @ p["W2"] + p["b2"])


if __name__ == "__main__":
    key = jax.random.PRNGKey(0)
    kx, kp = jax.random.split(key)

    x_batch = jax.random.normal(kx, (BATCH, N_NODES, IN_CH), dtype=jnp.float32)
    labels = jnp.arange(N_NODES) % N_CLASS          # deterministic; every class present
    H = build_incidence_matrix_from_labels(labels)
    G = generate_G_from_H(H)
    params = init_params(kp)
    slab = pack_params(params)

    out = hgnn_forward(x_batch, G, slab)
    out = jax.block_until_ready(out)
    assert out.shape == (BATCH, N_NODES, N_CLASS)

    # bf16 MXU operands => compare against the f32 reference with a bf16-level
    # tolerance (documented per review; typical |err| is a few 1e-3).
    ref = reference_forward(x_batch, G, params)
    if not bool(jnp.allclose(out, ref, atol=1e-2, rtol=1e-2)):
        err = float(jnp.max(jnp.abs(out - ref)))
        raise AssertionError(f"kernel/reference mismatch, max abs err {err}")

    print("KERNEL_OK")
</pallas_src>

<mosaic_0001>
module attributes {stable_mosaic.version = 11 : i64} {
  func.func @hgnn_kernel(%arg0: i32, %arg1: memref<1x32x16xf32, #tpu.memory_space<vmem>>, %arg2: memref<32x32xf32, #tpu.memory_space<vmem>>, %arg3: memref<160x128xf32, #tpu.memory_space<vmem>>, %arg4: memref<1x32x128xf32, #tpu.memory_space<vmem>>) attributes {dimension_semantics = [#tpu.dimension_semantics<parallel>], iteration_bounds = array<i64: 8>, scalar_prefetch = 0 : i64, scratch_operands = 0 : i64, tpu.core_type = #tpu.core_type<tc>, window_params = [{transform_indices = @transform_0, window_bounds = array<i64: 1, 32, 16>}, {pipeline_mode = #tpu.pipeline_mode<synchronous>, transform_indices = @transform_1, window_bounds = array<i64: 32, 32>}, {pipeline_mode = #tpu.pipeline_mode<synchronous>, transform_indices = @transform_2, window_bounds = array<i64: 160, 128>}, {transform_indices = @transform_3, window_bounds = array<i64: 1, 32, 128>}]} {
    %c0 = arith.constant 0 : index
    %c0_0 = arith.constant 0 : index
    %c0_1 = arith.constant 0 : index
    %0 = vector.load %arg1[%c0, %c0_0, %c0_1] : memref<1x32x16xf32, #tpu.memory_space<vmem>>, vector<1x32x16xf32>
    %1 = vector.shape_cast %0 : vector<1x32x16xf32> to vector<32x16xf32>
    %c0_2 = arith.constant 0 : index
    %c0_3 = arith.constant 0 : index
    %2 = vector.load %arg2[%c0_2, %c0_3] : memref<32x32xf32, #tpu.memory_space<vmem>>, vector<32x32xf32>
    %3 = arith.truncf %2 : vector<32x32xf32> to vector<32x32xbf16>
    %c0_4 = arith.constant 0 : index
    %c0_5 = arith.constant 0 : index
    %4 = vector.load %arg3[%c0_4, %c0_5] : memref<160x128xf32, #tpu.memory_space<vmem>>, vector<16x128xf32>
    %c16 = arith.constant 16 : index
    %c0_6 = arith.constant 0 : index
    %5 = vector.load %arg3[%c16, %c0_6] : memref<160x128xf32, #tpu.memory_space<vmem>>, vector<1x128xf32>
    %c24 = arith.constant 24 : index
    %c0_7 = arith.constant 0 : index
    %6 = vector.load %arg3[%c24, %c0_7] : memref<160x128xf32, #tpu.memory_space<vmem>>, vector<128x128xf32>
    %c152 = arith.constant 152 : index
    %c0_8 = arith.constant 0 : index
    %7 = vector.load %arg3[%c152, %c0_8] : memref<160x128xf32, #tpu.memory_space<vmem>>, vector<1x128xf32>
    %cst = arith.constant dense<0.000000e+00> : vector<32xf32>
    %8 = vector.multi_reduction <add>, %2, %cst [1] : vector<32x32xf32> to vector<32xf32>
    %9 = vector.shape_cast %8 : vector<32xf32> to vector<32x1xf32>
    %10 = arith.truncf %1 : vector<32x16xf32> to vector<32x16xbf16>
    %cst_9 = arith.constant dense<0.000000e+00> : vector<32x16xf32>
    %11 = tpu.matmul %3, %10, %cst_9 {dimension_numbers = #tpu.dot_dimension_numbers<[1], [0], [0], [1], [0, 0, 1, 1], [], []>} : vector<32x32xbf16>, vector<32x16xbf16>, vector<32x16xf32> -> vector<32x16xf32>
    %12 = arith.truncf %11 : vector<32x16xf32> to vector<32x16xbf16>
    %13 = arith.truncf %4 : vector<16x128xf32> to vector<16x128xbf16>
    %cst_10 = arith.constant dense<0.000000e+00> : vector<32x128xf32>
    %14 = tpu.matmul %12, %13, %cst_10 {dimension_numbers = #tpu.dot_dimension_numbers<[1], [0], [0], [1], [0, 0, 1, 1], [], []>} : vector<32x16xbf16>, vector<16x128xbf16>, vector<32x128xf32> -> vector<32x128xf32>
    %15 = vector.broadcast %9 : vector<32x1xf32> to vector<32x128xf32>
    %16 = vector.broadcast %5 : vector<1x128xf32> to vector<32x128xf32>
    %17 = arith.mulf %15, %16 : vector<32x128xf32>
    %18 = arith.addf %14, %17 : vector<32x128xf32>
    %cst_11 = arith.constant 0.000000e+00 : f32
    %19 = vector.broadcast %cst_11 : f32 to vector<32x128xf32>
    %20 = arith.maximumf %18, %19 : vector<32x128xf32>
    %21 = arith.truncf %20 : vector<32x128xf32> to vector<32x128xbf16>
    %22 = arith.truncf %6 : vector<128x128xf32> to vector<128x128xbf16>
    %cst_12 = arith.constant dense<0.000000e+00> : vector<32x128xf32>
    %23 = tpu.matmul %21, %22, %cst_12 {dimension_numbers = #tpu.dot_dimension_numbers<[1], [0], [0], [1], [0, 0, 1, 1], [], []>} : vector<32x128xbf16>, vector<128x128xbf16>, vector<32x128xf32> -> vector<32x128xf32>
    %24 = vector.broadcast %7 : vector<1x128xf32> to vector<32x128xf32>
    %25 = arith.addf %23, %24 : vector<32x128xf32>
    %26 = arith.truncf %25 : vector<32x128xf32> to vector<32x128xbf16>
    %cst_13 = arith.constant dense<0.000000e+00> : vector<32x128xf32>
    %27 = tpu.matmul %3, %26, %cst_13 {dimension_numbers = #tpu.dot_dimension_numbers<[1], [0], [0], [1], [0, 0, 1, 1], [], []>} : vector<32x32xbf16>, vector<32x128xbf16>, vector<32x128xf32> -> vector<32x128xf32>
    %c0_14 = arith.constant 0 : index
    %c0_15 = arith.constant 0 : index
    %c0_16 = arith.constant 0 : index
    %28 = vector.load %arg4[%c0_14, %c0_15, %c0_16] : memref<1x32x128xf32, #tpu.memory_space<vmem>>, vector<1x32x128xf32>
    %29 = vector.shape_cast %28 : vector<1x32x128xf32> to vector<32x128xf32>
    %30 = vector.shape_cast %27 : vector<32x128xf32> to vector<1x32x128xf32>
    tpu.vector_store %arg4[%c0_14, %c0_15, %c0_16], %30 {strides = array<i32>} : memref<1x32x128xf32, #tpu.memory_space<vmem>>, vector<1x32x128xf32>,
    return
  }
  func.func @transform_0(%arg0: i32) -> (i32, i32, i32) {
    %c0_i32 = arith.constant 0 : i32
    %c0_i32_0 = arith.constant 0 : i32
    %c0_i32_1 = arith.constant 0 : i32
    return %arg0, %c0_i32, %c0_i32_0 : i32, i32, i32
  }
  func.func @transform_1(%arg0: i32) -> (i32, i32) {
    %c0_i32 = arith.constant 0 : i32
    %c0_i32_0 = arith.constant 0 : i32
    %c0_i32_1 = arith.constant 0 : i32
    return %c0_i32, %c0_i32_0 : i32, i32
  }
  func.func @transform_2(%arg0: i32) -> (i32, i32) {
    %c0_i32 = arith.constant 0 : i32
    %c0_i32_0 = arith.constant 0 : i32
    %c0_i32_1 = arith.constant 0 : i32
    return %c0_i32, %c0_i32_0 : i32, i32
  }
  func.func @transform_3(%arg0: i32) -> (i32, i32, i32) {
    %c0_i32 = arith.constant 0 : i32
    %c0_i32_0 = arith.constant 0 : i32
    %c0_i32_1 = arith.constant 0 : i32
    return %arg0, %c0_i32, %c0_i32_0 : i32, i32, i32
  }
}

</mosaic_0001>

<llo_original>
// kernel: tpu_custom_call.1
$region0: #{tpu_custom_call.1}
  #allocation0 [shape = 'u32[]', space=smem, size = 0x4, offset = 0x4, fixed_abs, tag = 'smem constant byte address 0x4 - core index']
  #allocation1 [shape = 'u32[144,128]{1,0:T(1,128)}', space=vmem, size = 0x12000, scoped, tag = 'internal scratch']
  %s0 = inlined_call_operand.vmem [shape: f32[8,32,16], index: 0, kind: input, shape index: {}]
  %s1 = inlined_call_operand.vmem [shape: f32[32,32], index: 1, kind: input, shape index: {}]
  %s2 = inlined_call_operand.vmem [shape: f32[160,128], index: 2, kind: input, shape index: {}]
  %s3 = inlined_call_operand.hbm [shape: f32[8,32,128], index: 3, kind: output, shape index: {}]
  %s4 = sld [smem:[#allocation0]]
  $region45: #{tpu_custom_call.1} parent=0
    _
  %s6 = ssub.s32 1, %s4
  %s7 = scalar_select 0, %s6, %s4
  $region1: #{tpu_custom_call.1} parent=0
    #allocation2 [shape = 'u8[32768]{0}', space=vmem, size = 0x8000, scoped, tag = 'output window, operand 0']
    #allocation3 [shape = 's32[2]{0}', space=sflag, size = 0x8, scoped, tag = 'scoped memory for tpu_custom_call.1']
    %8 = vsyncpa [#allocation3], 0
    %s9 = scalar_lea.sflag [#allocation3], 1
    %10 = vsyncpa %s9, 0
    loop: start=0, step=1, limit=10
    $region2: #{tpu_custom_call.1} parent=1 // loop_pre_header
      _
    $region3: #{tpu_custom_call.1} parent=1 // loop_header
      %s12 = sphi 0, %s16
      %p13 = scmp.ge.s32.totalorder %s12, 10
      %s22 = sphi 0, %s24
      %s25 = sphi 0, %s22
      %s26 = sphi 0, %s25
      %s42 = sphi 0, %s26
      %s46 = sphi 0, %s46
      %s48 = sphi 0, %s46
      %s49 = sphi 0, %s48
      %s63 = sphi 0, %s49
      %s67 = sphi 0, %s67
      %s69 = sphi 0, %s67
      %s70 = sphi 0, %s69
      %s84 = sphi 0, %s70
      %s90 = sphi 0, %s92
      %s93 = sphi 0, %s90
      %s94 = sphi 0, %s93
      %s110 = sphi 0, %s94
    $region4: #{tpu_custom_call.1} parent=1 // loop_header_branch
      %15 = sbr.rel (%p13) target = $region8
    $region5: #{tpu_custom_call.1} parent=1 // loop_body
      %s17 = ssub.s32 %s12, 1
      %s18 = ssub.s32 %s12, 2
      %s19 = sadd.s32 %s12, 1
      %s20 = ssub.s32 %s12, %s19
      %p21 = scmp.eq.s32.totalorder %s20, 0
      %s23 = sadd.s32 %s22, 1
      %s24 = scalar_select %p21, %s22, %s23
      %p27 = pneg %p21
      %p28 = scmp.eq.s32.totalorder %s12, 7
      %p29 = por %p27, %p28
      %p30 = scmp.ne.s32.totalorder %s22, %s25
      %p31 = scmp.eq.s32.totalorder %s12, 0
      %p32 = por %p30, %p31
      %p33 = scmp.ne.s32.totalorder %s22, %s25
      %p34 = scmp.eq.s32.totalorder %s17, 7
      %p35 = por %p33, %p34
      %p36 = scmp.ne.s32.totalorder %s25, %s26
      %p37 = scmp.eq.s32.totalorder %s17, 0
      %p38 = por %p36, %p37
      %p39 = scmp.ne.s32.totalorder %s25, %s26
      %p40 = scmp.eq.s32.totalorder %s18, 7
      %p41 = por %p39, %p40
      %p43 = scmp.ne.s32.totalorder %s26, %s42
      %p44 = scmp.eq.s32.totalorder %s18, 0
      %p45 = por %p43, %p44
      %s47 = sadd.s32 %s46, 1
      %p50 = scmp.eq.s32.totalorder %s12, 7
      %p51 = scmp.ne.s32.totalorder %s46, %s48
      %p52 = scmp.eq.s32.totalorder %s12, 0
      %p53 = por %p51, %p52
      %p54 = scmp.ne.s32.totalorder %s46, %s48
      %p55 = scmp.eq.s32.totalorder %s17, 7
      %p56 = por %p54, %p55
      %p57 = scmp.ne.s32.totalorder %s48, %s49
      %p58 = scmp.eq.s32.totalorder %s17, 0
      %p59 = por %p57, %p58
      %p60 = scmp.ne.s32.totalorder %s48, %s49
      %p61 = scmp.eq.s32.totalorder %s18, 7
      %p62 = por %p60, %p61
      %p64 = scmp.ne.s32.totalorder %s49, %s63
      %p65 = scmp.eq.s32.totalorder %s18, 0
      %p66 = por %p64, %p65
      %s68 = sadd.s32 %s67, 1
      %p71 = scmp.eq.s32.totalorder %s12, 7
      %p72 = scmp.ne.s32.totalorder %s67, %s69
      %p73 = scmp.eq.s32.totalorder %s12, 0
      %p74 = por %p72, %p73
      %p75 = scmp.ne.s32.totalorder %s67, %s69
      %p76 = scmp.eq.s32.totalorder %s17, 7
      %p77 = por %p75, %p76
      %p78 = scmp.ne.s32.totalorder %s69, %s70
      %p79 = scmp.eq.s32.totalorder %s17, 0
      %p80 = por %p78, %p79
      %p81 = scmp.ne.s32.totalorder %s69, %s70
      %p82 = scmp.eq.s32.totalorder %s18, 7
      %p83 = por %p81, %p82
      %p85 = scmp.ne.s32.totalorder %s70, %s84
      %p86 = scmp.eq.s32.totalorder %s18, 0
      %p87 = por %p85, %p86
      %s88 = ssub.s32 %s12, %s19
      %p89 = scmp.eq.s32.totalorder %s88, 0
      %s91 = sadd.s32 %s90, 1
      %s92 = scalar_select %p89, %s90, %s91
      %p95 = pneg %p89
      %p96 = scmp.eq.s32.totalorder %s12, 7
      %p97 = por %p95, %p96
      %p98 = scmp.ne.s32.totalorder %s90, %s93
      %p99 = scmp.eq.s32.totalorder %s12, 0
      %p100 = por %p98, %p99
      %p101 = scmp.ne.s32.totalorder %s90, %s93
      %p102 = scmp.eq.s32.totalorder %s17, 7
      %p103 = por %p101, %p102
      %p104 = scmp.ne.s32.totalorder %s93, %s94
      %p105 = scmp.eq.s32.totalorder %s17, 0
      %p106 = por %p104, %p105
      %p107 = scmp.ne.s32.totalorder %s93, %s94
      %p108 = scmp.eq.s32.totalorder %s18, 7
      %p109 = por %p107, %p108
      %p111 = scmp.ne.s32.totalorder %s94, %s110
      %p112 = scmp.eq.s32.totalorder %s18, 0
      %p113 = por %p111, %p112
      %p114 = scmp.le.s32.totalorder 1, %s12
      %p115 = scmp.lt.s32.totalorder %s12, 9
      %p116 = pnand %p114, %p115
      %p117 = pneg %p116
      // Predicated region
      $region9: #{tpu_custom_call.1} parent=5 // pred_check
        _
      $region10: #{tpu_custom_call.1} parent=5 // pred_check_branch
        %119 = sbr.rel (%p116) target = $region12
      $region11: #{tpu_custom_call.1} parent=5 // pred_region
        %s120 = ssub.s32 %s12, 1
        // Predicated region
        $region13: #{tpu_custom_call.1} parent=11 // pred_check
          %p121 = pneg %p59
        $region14: #{tpu_custom_call.1} parent=11 // pred_check_branch
          %123 = sbr.rel (%p121) target = $region16
        $region15: #{tpu_custom_call.1} parent=11 // pred_region
          _
        $region16: #{tpu_custom_call.1} parent=11 // pred_fallthru
          _
        // Predicated region
        $region17: #{tpu_custom_call.1} parent=11 // pred_check
          %p124 = pneg %p80
        $region18: #{tpu_custom_call.1} parent=11 // pred_check_branch
          %126 = sbr.rel (%p124) target = $region20
        $region19: #{tpu_custom_call.1} parent=11 // pred_region
          _
        $region20: #{tpu_custom_call.1} parent=11 // pred_fallthru
          _
      $region12: #{tpu_custom_call.1} parent=5 // pred_fallthru
        _
      %p127 = scmp.lt.s32.totalorder %s12, 8
      // Predicated region
      $region21: #{tpu_custom_call.1} parent=5 // pred_check
        %p128 = pneg %p127
      $region22: #{tpu_custom_call.1} parent=5 // pred_check_branch
        %130 = sbr.rel (%p128) target = $region24
      $region23: #{tpu_custom_call.1} parent=5 // pred_region
        // Predicated region
        $region25: #{tpu_custom_call.1} parent=23 // pred_check
          %p131 = pneg %p32
        $region26: #{tpu_custom_call.1} parent=23 // pred_check_branch
          %133 = sbr.rel (%p131) target = $region28
        $region27: #{tpu_custom_call.1} parent=23 // pred_region
          %p134 = scmp.lt.s32.totalorder %s12, 7
          %s135 = scalar_select %p134, %s12, 7
          %s136 = smul.addr %s135, 4
          %s137 = smul.addr %s136, 8
          %s138 = scalar_lea.vmem %s0, %s137
        $region28: #{tpu_custom_call.1} parent=23 // pred_fallthru
          _
      $region24: #{tpu_custom_call.1} parent=5 // pred_fallthru
        _
      %p139 = scmp.le.s32.totalorder 1, %s12
      %p140 = scmp.lt.s32.totalorder %s12, 9
      %p141 = pnand %p139, %p140
      %p142 = pneg %p141
      // Predicated region
      $region29: #{tpu_custom_call.1} parent=5 // pred_check
        _
      $region30: #{tpu_custom_call.1} parent=5 // pred_check_branch
        %144 = sbr.rel (%p141) target = $region32
      $region31: #{tpu_custom_call.1} parent=5 // pred_region
        %s145 = ssub.s32 %s12, 1
        %p146 = scmp.lt.s32.totalorder %s17, 7
        %s147 = scalar_select %p146, %s17, 7
        %s148 = smul.addr %s147, 4
        %s149 = smul.addr %s148, 8
        %s150 = scalar_lea.vmem %s0, %s149
        %p151 = pneg %p38
        %p152 = pneg %p35
        %p153 = pneg %p59
        %p154 = pneg %p56
        %p155 = pneg %p80
        %p156 = pneg %p77
        %p157 = pneg %p106
        %p158 = pneg %p103
        %s159 = sand.u32 %s93, 1
        %s160 = scalar_lea.sflag [#allocation3], %s159
        %s161 = sand.u32 %s93, 1
        %s162 = smul.addr %s161, 32
        %s163 = scalar_lea.vmem [#allocation2], %s162
        %p164 = scmp.lt.s32.totalorder %s17, 7
        %s165 = scalar_select %p164, %s17, 7
        %s166 = smul.addr %s165, 4
        %s167 = smul.addr %s166, 8
        %s168 = scalar_lea.vmem %s0, %s167
        %v170 = vld [vmem:[%s168] sm:$0xff]
        %v171 = vld [vmem:[%s168 + $0x8] sm:$0xff]
        %v172 = vld [vmem:[%s168 + $0x10] sm:$0xff]
        %v173 = vld [vmem:[%s168 + $0x18] sm:$0xff]
        %v174 = vld [vmem:[%s1] sm:$0xff]
        %v175 = vld [vmem:[%s1 + $0x8] sm:$0xff]
        %v176 = vld [vmem:[%s1 + $0x10] sm:$0xff]
        %v177 = vld [vmem:[%s1 + $0x18] sm:$0xff]
        %v178 = vpack.c.bf16 %v175, %v174
        %v179 = vpack.c.bf16 %v177, %v176
        %v180 = vld [vmem:[%s2] sm:$0xff]
        %v181 = vld [vmem:[%s2 + $0x8] sm:$0xff]
        %v182 = vld [vmem:[%s2 + $0x10] sm:$0x1]
        %v183 = vld [vmem:[%s2 + $0x18] sm:$0xff]
        %v184 = vld [vmem:[%s2 + $0x20] sm:$0xff]
        %v185 = vld [vmem:[%s2 + $0x28] sm:$0xff]
        %v186 = vld [vmem:[%s2 + $0x30] sm:$0xff]
        %v187 = vld [vmem:[%s2 + $0x38] sm:$0xff]
        %v188 = vld [vmem:[%s2 + $0x40] sm:$0xff]
        %v189 = vld [vmem:[%s2 + $0x48] sm:$0xff]
        %v190 = vld [vmem:[%s2 + $0x50] sm:$0xff]
        %v191 = vld [vmem:[%s2 + $0x58] sm:$0xff]
        %v192 = vld [vmem:[%s2 + $0x60] sm:$0xff]
        %v193 = vld [vmem:[%s2 + $0x68] sm:$0xff]
        %v194 = vld [vmem:[%s2 + $0x70] sm:$0xff]
        %v195 = vld [vmem:[%s2 + $0x78] sm:$0xff]
        %v196 = vld [vmem:[%s2 + $0x80] sm:$0xff]
        %v197 = vld [vmem:[%s2 + $0x88] sm:$0xff]
        %v198 = vld [vmem:[%s2 + $0x90] sm:$0xff]
        %v199 = vld [vmem:[%s2 + $0x98] sm:$0x1]
        %vm200 = vcmask 261120
        %v201 = vsel %vm200, %v174, 0.0
        %202 = vadd.xlane.f32.xlu0 %v201
        %v203 = vpop.xlane.xlu0 %202
        %v204 = vsel %vm200, %v175, 0.0
        %205 = vadd.xlane.f32.xlu0 %v204
        %v206 = vpop.xlane.xlu0 %205
        %v207 = vsel %vm200, %v176, 0.0
        %208 = vadd.xlane.f32.xlu0 %v207
        %v209 = vpop.xlane.xlu0 %208
        %v210 = vsel %vm200, %v177, 0.0
        %211 = vadd.xlane.f32.xlu0 %v210
        %v212 = vpop.xlane.xlu0 %211
        %v213 = vpack.c.bf16 %v171, %v170
        %v214 = vpack.c.bf16 %v173, %v172
        %v216 = vsel %vm200, %v178, 0
        %v219 = vsel %vm200, %v179, 0
        %221 = vmatprep.subr.bf16.mxu0 0
        %222 = vmatpush1.bf16.msra.mxu0 %v213
        %223 = vmatprep.subr.bf16.mxu0 0
        %224 = vmatpush1.bf16.msra.mxu0 %v214
        %225 = vmatprep.subr.bf16.mxu0 0
        %226 = vmatpush1.bf16.msra.mxu0 0
        %227 = vmatprep.subr.bf16.mxu0 0
        %228 = vmatpush1.bf16.msra.mxu0 0
        %229 = vmatprep.subr.bf16.mxu0 0
        %230 = vmatpush1.bf16.msra.mxu0 0
        %231 = vmatprep.subr.bf16.mxu0 0
        %232 = vmatpush1.bf16.msra.mxu0 0
        %233 = vmatprep.subr.bf16.mxu0 0
        %234 = vmatpush1.bf16.msra.mxu0 0
        %235 = vmatprep.subr.bf16.mxu0 0
        %236 = vmatpush1.bf16.msra.mxu0 0
        %237 = vmatprep.subr.bf16.mxu0 0
        %238 = vmatpush1.bf16.msra.mxu0 0
        %239 = vmatprep.subr.bf16.mxu0 0
        %240 = vmatpush1.bf16.msra.mxu0 0
        %241 = vmatprep.subr.bf16.mxu0 0
        %242 = vmatpush1.bf16.msra.mxu0 0
        %243 = vmatprep.subr.bf16.mxu0 0
        %244 = vmatpush1.bf16.msra.mxu0 0
        %245 = vmatprep.subr.bf16.mxu0 0
        %246 = vmatpush1.bf16.msra.mxu0 0
        %247 = vmatprep.subr.bf16.mxu0 0
        %248 = vmatpush1.bf16.msra.mxu0 0
        %249 = vmatprep.subr.bf16.mxu0 0
        %250 = vmatpush1.bf16.msra.mxu0 0
        %251 = vmatprep.subr.bf16.mxu0 0
        %252 = vmatpush1.bf16.msra.mxu0 0
        %253 = vmatprep.mubr.bf16.mxu0 0
        %254 = vmatmul.mubr.bf16.gmra.mrb[0].mxu0 %v216
        %v255 = vpop.f32.mrb[0].mxu0
        %v256 = vadd.f32 0.0, %v255
        %v257 = vpop.f32.mrb[0].mxu0
        %v258 = vpop.f32.mrb[0].mxu0
        %v259 = vadd.f32 0.0, %v258
        %v260 = vpop.f32.mrb[0].mxu0
        %261 = vmatprep.mubr.bf16.mxu0 0
        %262 = vmatmul.mubr.bf16.gmra.mrb[0].mxu0 %v219
        %v263 = vpop.f32.mrb[0].mxu0
        %v264 = vadd.f32 0.0, %v263
        %v265 = vpop.f32.mrb[0].mxu0
        %v266 = vpop.f32.mrb[0].mxu0
        %v267 = vadd.f32 0.0, %v266
        %v268 = vpop.f32.mrb[0].mxu0
        %269 = vdwg.mxu0
        %v270 = vpack.c.bf16 %v259, %v256
        %v271 = vpack.c.bf16 %v267, %v264
        %v272 = vpack.c.bf16 %v181, %v180
        %v273 = vlaneseq
        %v274 = vshrl.u32 %v273, 7
        %v275 = vsub.s32 0, %v274
        %v276 = vrot.slane %v182, %v275
        %v277 = vmul.f32 %v203, %v276
        %v278 = vmul.f32 %v206, %v276
        %v279 = vmul.f32 %v209, %v276
        %v280 = vmul.f32 %v212, %v276
        %vm281 = vcmask 130048
        %v283 = vsel %vm281, %v270, 0
        %v286 = vsel %vm281, %v271, 0
        %288 = vmatprep.subr.bf16.mxu0 0
        %289 = vmatpush1.bf16.msra.mxu0 %v272
        %290 = vmatprep.subr.bf16.mxu0 0
        %291 = vmatpush1.bf16.msra.mxu0 0
        %292 = vmatprep.subr.bf16.mxu0 0
        %293 = vmatpush1.bf16.msra.mxu0 0
        %294 = vmatprep.subr.bf16.mxu0 0
        %295 = vmatpush1.bf16.msra.mxu0 0
        %296 = vmatprep.subr.bf16.mxu0 0
        %297 = vmatpush1.bf16.msra.mxu0 0
        %298 = vmatprep.subr.bf16.mxu0 0
        %299 = vmatpush1.bf16.msra.mxu0 0
        %300 = vmatprep.subr.bf16.mxu0 0
        %301 = vmatpush1.bf16.msra.mxu0 0
        %302 = vmatprep.subr.bf16.mxu0 0
        %303 = vmatpush1.bf16.msra.mxu0 0
        %304 = vmatprep.subr.bf16.mxu0 0
        %305 = vmatpush1.bf16.msra.mxu0 0
        %306 = vmatprep.subr.bf16.mxu0 0
        %307 = vmatpush1.bf16.msra.mxu0 0
        %308 = vmatprep.subr.bf16.mxu0 0
        %309 = vmatpush1.bf16.msra.mxu0 0
        %310 = vmatprep.subr.bf16.mxu0 0
        %311 = vmatpush1.bf16.msra.mxu0 0
        %312 = vmatprep.subr.bf16.mxu0 0
        %313 = vmatpush1.bf16.msra.mxu0 0
        %314 = vmatprep.subr.bf16.mxu0 0
        %315 = vmatpush1.bf16.msra.mxu0 0
        %316 = vmatprep.subr.bf16.mxu0 0
        %317 = vmatpush1.bf16.msra.mxu0 0
        %318 = vmatprep.subr.bf16.mxu0 0
        %319 = vmatpush1.bf16.msra.mxu0 0
        %320 = vmatprep.mubr.bf16.mxu0 0
        %321 = vmatmul.mubr.bf16.gmra.mrb[0].mxu0 %v283
        %v322 = vpop.f32.mrb[0].mxu0
        %v323 = vadd.f32 %v277, %v322
        %v324 = vpop.f32.mrb[0].mxu0
        %v325 = vpop.f32.mrb[0].mxu0
        %v326 = vadd.f32 %v278, %v325
        %v327 = vpop.f32.mrb[0].mxu0
        %328 = vmatprep.mubr.bf16.mxu0 0
        %329 = vmatmul.mubr.bf16.gmra.mrb[0].mxu0 %v286
        %v330 = vpop.f32.mrb[0].mxu0
        %v331 = vadd.f32 %v279, %v330
        %v332 = vpop.f32.mrb[0].mxu0
        %v333 = vpop.f32.mrb[0].mxu0
        %v334 = vadd.f32 %v280, %v333
        %v335 = vpop.f32.mrb[0].mxu0
        %336 = vdwg.mxu0
        %v337 = vmax.f32 %v323, 0.0
        %v338 = vmax.f32 %v326, 0.0
        %v339 = vmax.f32 %v331, 0.0
        %v340 = vmax.f32 %v334, 0.0
        %v341 = vpack.c.bf16 %v338, %v337
        %v342 = vpack.c.bf16 %v340, %v339
        %v343 = vpack.c.bf16 %v184, %v183
        %v344 = vpack.c.bf16 %v186, %v185
        %v345 = vpack.c.bf16 %v188, %v187
        %v346 = vpack.c.bf16 %v190, %v189
        %v347 = vpack.c.bf16 %v192, %v191
        %v348 = vpack.c.bf16 %v194, %v193
        %v349 = vpack.c.bf16 %v196, %v195
        %v350 = vpack.c.bf16 %v198, %v197
        %v351 = vlaneseq
        %v352 = vshrl.u32 %v351, 7
        %v353 = vsub.s32 0, %v352
        %v354 = vrot.slane %v199, %v353
        %355 = vmatprep.subr.bf16.mxu0 0
        %356 = vmatpush1.bf16.msra.mxu0 %v343
        %357 = vmatprep.subr.bf16.mxu0 0
        %358 = vmatpush1.bf16.msra.mxu0 %v344
        %359 = vmatprep.subr.bf16.mxu0 0
        %360 = vmatpush1.bf16.msra.mxu0 %v345
        %361 = vmatprep.subr.bf16.mxu0 0
        %362 = vmatpush1.bf16.msra.mxu0 %v346
        %363 = vmatprep.subr.bf16.mxu0 0
        %364 = vmatpush1.bf16.msra.mxu0 %v347
        %365 = vmatprep.subr.bf16.mxu0 0
        %366 = vmatpush1.bf16.msra.mxu0 %v348
        %367 = vmatprep.subr.bf16.mxu0 0
        %368 = vmatpush1.bf16.msra.mxu0 %v349
        %369 = vmatprep.subr.bf16.mxu0 0
        %370 = vmatpush1.bf16.msra.mxu0 %v350
        %371 = vmatprep.subr.bf16.mxu0 0
        %372 = vmatpush1.bf16.msra.mxu0 0
        %373 = vmatprep.subr.bf16.mxu0 0
        %374 = vmatpush1.bf16.msra.mxu0 0
        %375 = vmatprep.subr.bf16.mxu0 0
        %376 = vmatpush1.bf16.msra.mxu0 0
        %377 = vmatprep.subr.bf16.mxu0 0
        %378 = vmatpush1.bf16.msra.mxu0 0
        %379 = vmatprep.subr.bf16.mxu0 0
        %380 = vmatpush1.bf16.msra.mxu0 0
        %381 = vmatprep.subr.bf16.mxu0 0
        %382 = vmatpush1.bf16.msra.mxu0 0
        %383 = vmatprep.subr.bf16.mxu0 0
        %384 = vmatpush1.bf16.msra.mxu0 0
        %385 = vmatprep.subr.bf16.mxu0 0
        %386 = vmatpush1.bf16.msra.mxu0 0
        %387 = vmatprep.mubr.bf16.mxu0 0
        %388 = vmatmul.mubr.bf16.gmra.mrb[0].mxu0 %v341
        %v389 = vpop.f32.mrb[0].mxu0
        %v390 = vadd.f32 %v354, %v389
        %v391 = vpop.f32.mrb[0].mxu0
        %v392 = vpop.f32.mrb[0].mxu0
        %v393 = vadd.f32 %v354, %v392
        %v394 = vpop.f32.mrb[0].mxu0
        %395 = vmatprep.mubr.bf16.mxu0 0
        %396 = vmatmul.mubr.bf16.gmra.mrb[0].mxu0 %v342
        %v397 = vpop.f32.mrb[0].mxu0
        %v398 = vadd.f32 %v354, %v397
        %v399 = vpop.f32.mrb[0].mxu0
        %v400 = vpop.f32.mrb[0].mxu0
        %v401 = vadd.f32 %v354, %v400
        %v402 = vpop.f32.mrb[0].mxu0
        %403 = vdwg.mxu0
        %v404 = vpack.c.bf16 %v393, %v390
        %v405 = vpack.c.bf16 %v401, %v398
        %406 = vmatprep.subr.bf16.mxu0 0
        %407 = vmatpush1.bf16.msra.mxu0 %v404
        %408 = vmatprep.subr.bf16.mxu0 0
        %409 = vmatpush1.bf16.msra.mxu0 %v405
        %410 = vmatprep.subr.bf16.mxu0 0
        %411 = vmatpush1.bf16.msra.mxu0 0
        %412 = vmatprep.subr.bf16.mxu0 0
        %413 = vmatpush1.bf16.msra.mxu0 0
        %414 = vmatprep.subr.bf16.mxu0 0
        %415 = vmatpush1.bf16.msra.mxu0 0
        %416 = vmatprep.subr.bf16.mxu0 0
        %417 = vmatpush1.bf16.msra.mxu0 0
        %418 = vmatprep.subr.bf16.mxu0 0
        %419 = vmatpush1.bf16.msra.mxu0 0
        %420 = vmatprep.subr.bf16.mxu0 0
        %421 = vmatpush1.bf16.msra.mxu0 0
        %422 = vmatprep.subr.bf16.mxu0 0
        %423 = vmatpush1.bf16.msra.mxu0 0
        %424 = vmatprep.subr.bf16.mxu0 0
        %425 = vmatpush1.bf16.msra.mxu0 0
        %426 = vmatprep.subr.bf16.mxu0 0
        %427 = vmatpush1.bf16.msra.mxu0 0
        %428 = vmatprep.subr.bf16.mxu0 0
        %429 = vmatpush1.bf16.msra.mxu0 0
        %430 = vmatprep.subr.bf16.mxu0 0
        %431 = vmatpush1.bf16.msra.mxu0 0
        %432 = vmatprep.subr.bf16.mxu0 0
        %433 = vmatpush1.bf16.msra.mxu0 0
        %434 = vmatprep.subr.bf16.mxu0 0
        %435 = vmatpush1.bf16.msra.mxu0 0
        %436 = vmatprep.subr.bf16.mxu0 0
        %437 = vmatpush1.bf16.msra.mxu0 0
        %438 = vmatprep.mubr.bf16.mxu0 0
        %439 = vmatmul.mubr.bf16.gmra.mrb[0].mxu0 %v216
        %v440 = vpop.f32.mrb[0].mxu0
        %v441 = vadd.f32 0.0, %v440
        %v442 = vpop.f32.mrb[0].mxu0
        %v443 = vpop.f32.mrb[0].mxu0
        %v444 = vadd.f32 0.0, %v443
        %v445 = vpop.f32.mrb[0].mxu0
        %446 = vmatprep.mubr.bf16.mxu0 0
        %447 = vmatmul.mubr.bf16.gmra.mrb[0].mxu0 %v219
        %v448 = vpop.f32.mrb[0].mxu0
        %v449 = vadd.f32 0.0, %v448
        %v450 = vpop.f32.mrb[0].mxu0
        %v451 = vpop.f32.mrb[0].mxu0
        %v452 = vadd.f32 0.0, %v451
        %v453 = vpop.f32.mrb[0].mxu0
        %454 = vdwg.mxu0
        %455 = vst [vmem:[%s163] sm:$0xff] %v441
        %456 = vst [vmem:[%s163 + $0x8] sm:$0xff] %v444
        %457 = vst [vmem:[%s163 + $0x10] sm:$0xff] %v449
        %458 = vst [vmem:[%s163 + $0x18] sm:$0xff] %v452
        %s459 = sand.u32 %s93, 1
        %s460 = scalar_lea.sflag [#allocation3], %s459
        %s461 = sand.u32 %s93, 1
        %s462 = smul.addr %s461, 32
        %s463 = scalar_lea.vmem [#allocation2], %s462
        // Predicated region
        $region33: #{tpu_custom_call.1} parent=31 // pred_check
          %p464 = pneg %p103
        $region34: #{tpu_custom_call.1} parent=31 // pred_check_branch
          %466 = sbr.rel (%p464) target = $region36
        $region35: #{tpu_custom_call.1} parent=31 // pred_region
          %s468 = ssub.s32 512, 512
          %469 = vsyncadd %s460, %s468
          %s470 = smul.addr %s17, 4
          %s471 = smul.addr %s470, 128
          %s472 = scalar_lea.hbm %s3, %s471
          %s473 = sshll.u32 %s463, 4
          %s474 = int_to_ptr.vmem [resolvable:$true] %s473
          %479 = dma.vmem_to_hbm [thread:$0]  %s474, 512, %s472, %s460, 128, 128, 8
        $region36: #{tpu_custom_call.1} parent=31 // pred_fallthru
          _
      $region32: #{tpu_custom_call.1} parent=5 // pred_fallthru
        _
      %p480 = scmp.le.s32.totalorder 2, %s12
      // Predicated region
      $region37: #{tpu_custom_call.1} parent=5 // pred_check
        %p481 = pneg %p480
      $region38: #{tpu_custom_call.1} parent=5 // pred_check_branch
        %483 = sbr.rel (%p481) target = $region40
      $region39: #{tpu_custom_call.1} parent=5 // pred_region
        %s484 = ssub.s32 %s12, 2
        // Predicated region
        $region41: #{tpu_custom_call.1} parent=39 // pred_check
          %p485 = pneg %p109
        $region42: #{tpu_custom_call.1} parent=39 // pred_check_branch
          %487 = sbr.rel (%p485) target = $region44
        $region43: #{tpu_custom_call.1} parent=39 // pred_region
          %s488 = sand.u32 %s94, 1
          %s489 = scalar_lea.sflag [#allocation3], %s488
          %s490 = sand.u32 %s94, 1
          %s491 = smul.addr %s490, 32
          %s492 = scalar_lea.vmem [#allocation2], %s491
          %493 = dma.done %s489, 512
        $region44: #{tpu_custom_call.1} parent=39 // pred_fallthru
          _
      $region40: #{tpu_custom_call.1} parent=5 // pred_fallthru
        _
    $region6: #{tpu_custom_call.1} parent=1 // loop_footer
      %s16 = sadd.s32 1, %s12
    $region7: #{tpu_custom_call.1} parent=1 // loop_footer_branch
      %11 = sbr.rel target = $region3
    $region8: #{tpu_custom_call.1} parent=1 // loop_exit
      _
    %494 = vsyncpa [#allocation3], 1
    %s495 = scalar_lea.sflag [#allocation3], 1
    %496 = vsyncpa %s495, 1

</llo_original>
